<compile_context>
chip_gen: v6e
topology: v6e:2x2x1
jax: 0.10.0
libtpu: 0.0.40
codegen_flags: <defaults>
</compile_context>

<pallas_src>
import jax
import jax.numpy as jnp
from jax.experimental import pallas as pl
from jax.experimental.pallas import tpu as pltpu


def _choice_conv1x1_kernel(x_ref, w_ref, b_ref, o_ref):
    # x_ref: (1, C_in, T)   -- one spatial tile; channels on sublanes, HW on lanes
    # w_ref: (C_out, C_in)  -- the selected op's 1x1-conv weight (grid-invariant)
    # b_ref: (C_out, 1)     -- the selected op's bias
    # o_ref: (1, C_out, T)
    x = x_ref[0]                     # (C_in, T)
    w = w_ref[...]                   # (C_out, C_in)
    b = b_ref[...]                   # (C_out, 1) -> broadcasts over lanes
    c_out, c_in = w.shape

    if c_in <= 16:
        # Tiny-channel regime: a (C_out, C_in) @ (C_in, T) matmul would use
        # <2% of the MXU; do the contraction as unrolled VPU FMAs instead
        # (broadcast weight column over lanes, input row over sublanes).
        acc = w[:, 0:1] * x[0:1, :]
        for ci in range(1, c_in):
            acc = acc + w[:, ci:ci + 1] * x[ci:ci + 1, :]
        y = acc + b
    else:
        # Large-channel regime: MXU matmul with f32 accumulation.
        # (bf16 inputs here would buy ~2x MXU rate on v6e/v7x for C >= 256,
        # at ~1e-3 relative rounding -- kept f32 to preserve exact semantics.)
        y = jnp.dot(w, x, preferred_element_type=jnp.float32) + b

    o_ref[0] = y.astype(o_ref.dtype)


def _pick_tile_hw(HW, C_in, C_out, dtype_bytes=4,
                  vmem_budget=20 << 20, max_tile=2048):
    """Pick a lane (spatial) tile: large (amortize ~0.35us/step grid overhead),
    but sized against a conservative VMEM budget so it also fits v7x's smaller
    VMEM (double-buffered input + output tiles)."""
    per_col = (C_in + C_out) * dtype_bytes * 2      # 2 pipeline buffers each
    cap = max(128, vmem_budget // max(per_col, 1))
    tile = min(max_tile, cap)
    if tile >= HW:
        return HW                                   # full dim: always legal
    return max(128, (tile // 128) * 128)            # else must be k*128


def proxyless_layer_choice_forward(x_nchw, weights, biases, sampled):
    """Forward of ProxylessLayerChoice: apply candidate op `sampled` to x.

    x_nchw : (N, C, H, W) float32
    weights: (K, C_out, C_in) float32  -- K candidate 1x1-conv weights
    biases : (K, C_out)       float32
    sampled: python int in [0, K)  (the module's self.sampled)
    """
    N, C, H, W = x_nchw.shape
    K, C_out, C_in = weights.shape
    assert C_in == C
    HW = H * W

    # Static op selection (self.sampled is a plain Python int after resample()).
    w_sel = weights[sampled]                        # (C_out, C_in)
    b_sel = biases[sampled].reshape(C_out, 1)       # (C_out, 1)

    # Pure metadata reshape: NCHW and (N, C, H*W) share the same HBM layout.
    x3 = x_nchw.reshape(N, C_in, HW)

    tile_hw = _pick_tile_hw(HW, C_in, C_out)
    grid = (N, pl.cdiv(HW, tile_hw))                # tail tile masked by Pallas

    out3 = pl.pallas_call(
        _choice_conv1x1_kernel,
        out_shape=jax.ShapeDtypeStruct((N, C_out, HW), x_nchw.dtype),
        grid=grid,
        in_specs=[
            # activations: one image, full channels, one spatial tile
            pl.BlockSpec((1, C_in, tile_hw), lambda n, h: (n, 0, h)),
            # selected weight / bias: whole array, grid-invariant block
            pl.BlockSpec((C_out, C_in), lambda n, h: (0, 0)),
            pl.BlockSpec((C_out, 1), lambda n, h: (0, 0)),
        ],
        out_specs=pl.BlockSpec((1, C_out, tile_hw), lambda n, h: (n, 0, h)),
        compiler_params=pltpu.CompilerParams(
            # both axes independent -> megacore can shard on v7x's 2 TCs
            dimension_semantics=("parallel", "parallel")),
    )(x3, w_sel, b_sel)

    # Metadata reshape back to NCHW.
    return out3.reshape(N, C_out, H, W)


if __name__ == "__main__":
    key = jax.random.PRNGKey(0)
    k_x, k_alpha, k_samp, k_w, k_b = jax.random.split(key, 5)

    # Small shapes consistent with the module's forward.
    N, C, H, W = 2, 4, 16, 16
    K = 3  # number of candidate ops

    x = jax.random.normal(k_x, (N, C, H, W), dtype=jnp.float32)

    # Module parameters (mirroring __init__ shapes):
    alpha = 0.001 * jax.random.normal(k_alpha, (K,), dtype=jnp.float32)
    binary_gates = jnp.zeros((K,), dtype=jnp.float32)  # no effect on fwd value

    # resample(): categorical draw over softmax(alpha).
    sampled = int(jax.random.categorical(k_samp, alpha))
    binary_gates = binary_gates.at[sampled].set(1.0)

    # Candidate-op parameters: K x Conv2d(C, C, kernel_size=1, bias=True).
    weights = 0.1 * jax.random.normal(k_w, (K, C, C), dtype=jnp.float32)  # (K, C_out, C_in)
    biases = 0.1 * jax.random.normal(k_b, (K, C), dtype=jnp.float32)

    out = proxyless_layer_choice_forward(x, weights, biases, sampled)
    out = jax.block_until_ready(out)

    # Reference: plain-JAX 1x1 conv with the sampled op's parameters.
    ref = (jnp.einsum("nchw,oc->nohw", x, weights[sampled])
           + biases[sampled][None, :, None, None])
    assert out.shape == (N, C, H, W)
    assert jnp.allclose(out, ref, rtol=1e-5, atol=1e-5)

    # TODO(synk): ArchGradientFunction.backward / finalize_grad (binary-gate
    # architecture gradients accumulated into alpha.grad) is training-time
    # autograd machinery with no forward-pass Pallas equivalent.
    print("KERNEL_OK")
</pallas_src>

<mosaic_0001>
module attributes {stable_mosaic.version = 11 : i64} {
  func.func @_choice_conv1x1_kernel(%arg0: i32, %arg1: i32, %arg2: memref<1x4x256xf32, #tpu.memory_space<vmem>>, %arg3: memref<4x4xf32, #tpu.memory_space<vmem>>, %arg4: memref<4x1xf32, #tpu.memory_space<vmem>>, %arg5: memref<1x4x256xf32, #tpu.memory_space<vmem>>) attributes {dimension_semantics = [#tpu.dimension_semantics<parallel>, #tpu.dimension_semantics<parallel>], iteration_bounds = array<i64: 2, 1>, scalar_prefetch = 0 : i64, scratch_operands = 0 : i64, tpu.core_type = #tpu.core_type<tc>, window_params = [{transform_indices = @transform_0, window_bounds = array<i64: 1, 4, 256>}, {pipeline_mode = #tpu.pipeline_mode<synchronous>, transform_indices = @transform_1, window_bounds = array<i64: 4, 4>}, {pipeline_mode = #tpu.pipeline_mode<synchronous>, transform_indices = @transform_2, window_bounds = array<i64: 4, 1>}, {transform_indices = @transform_3, window_bounds = array<i64: 1, 4, 256>}]} {
    %c0 = arith.constant 0 : index
    %c0_0 = arith.constant 0 : index
    %c0_1 = arith.constant 0 : index
    %0 = vector.load %arg2[%c0, %c0_0, %c0_1] : memref<1x4x256xf32, #tpu.memory_space<vmem>>, vector<1x4x256xf32>
    %1 = vector.shape_cast %0 : vector<1x4x256xf32> to vector<4x256xf32>
    %c0_2 = arith.constant 0 : index
    %c0_3 = arith.constant 0 : index
    %2 = vector.load %arg3[%c0_2, %c0_3] : memref<4x4xf32, #tpu.memory_space<vmem>>, vector<4x4xf32>
    %c0_4 = arith.constant 0 : index
    %c0_5 = arith.constant 0 : index
    %3 = vector.load %arg4[%c0_4, %c0_5] : memref<4x1xf32, #tpu.memory_space<vmem>>, vector<4x1xf32>
    %4 = vector.extract_strided_slice %2 {offsets = [0, 0], sizes = [4, 1], strides = [1, 1]} : vector<4x4xf32> to vector<4x1xf32>
    %5 = vector.extract_strided_slice %1 {offsets = [0, 0], sizes = [1, 256], strides = [1, 1]} : vector<4x256xf32> to vector<1x256xf32>
    %6 = vector.broadcast %4 : vector<4x1xf32> to vector<4x256xf32>
    %7 = vector.broadcast %5 : vector<1x256xf32> to vector<4x256xf32>
    %8 = arith.mulf %6, %7 : vector<4x256xf32>
    %9 = vector.extract_strided_slice %2 {offsets = [0, 1], sizes = [4, 1], strides = [1, 1]} : vector<4x4xf32> to vector<4x1xf32>
    %10 = vector.extract_strided_slice %1 {offsets = [1, 0], sizes = [1, 256], strides = [1, 1]} : vector<4x256xf32> to vector<1x256xf32>
    %11 = vector.broadcast %9 : vector<4x1xf32> to vector<4x256xf32>
    %12 = vector.broadcast %10 : vector<1x256xf32> to vector<4x256xf32>
    %13 = arith.mulf %11, %12 : vector<4x256xf32>
    %14 = arith.addf %8, %13 : vector<4x256xf32>
    %15 = vector.extract_strided_slice %2 {offsets = [0, 2], sizes = [4, 1], strides = [1, 1]} : vector<4x4xf32> to vector<4x1xf32>
    %16 = vector.extract_strided_slice %1 {offsets = [2, 0], sizes = [1, 256], strides = [1, 1]} : vector<4x256xf32> to vector<1x256xf32>
    %17 = vector.broadcast %15 : vector<4x1xf32> to vector<4x256xf32>
    %18 = vector.broadcast %16 : vector<1x256xf32> to vector<4x256xf32>
    %19 = arith.mulf %17, %18 : vector<4x256xf32>
    %20 = arith.addf %14, %19 : vector<4x256xf32>
    %21 = vector.extract_strided_slice %2 {offsets = [0, 3], sizes = [4, 1], strides = [1, 1]} : vector<4x4xf32> to vector<4x1xf32>
    %22 = vector.extract_strided_slice %1 {offsets = [3, 0], sizes = [1, 256], strides = [1, 1]} : vector<4x256xf32> to vector<1x256xf32>
    %23 = vector.broadcast %21 : vector<4x1xf32> to vector<4x256xf32>
    %24 = vector.broadcast %22 : vector<1x256xf32> to vector<4x256xf32>
    %25 = arith.mulf %23, %24 : vector<4x256xf32>
    %26 = arith.addf %20, %25 : vector<4x256xf32>
    %27 = vector.broadcast %3 : vector<4x1xf32> to vector<4x256xf32>
    %28 = arith.addf %26, %27 : vector<4x256xf32>
    %c0_6 = arith.constant 0 : index
    %c0_7 = arith.constant 0 : index
    %c0_8 = arith.constant 0 : index
    %29 = vector.load %arg5[%c0_6, %c0_7, %c0_8] : memref<1x4x256xf32, #tpu.memory_space<vmem>>, vector<1x4x256xf32>
    %30 = vector.shape_cast %29 : vector<1x4x256xf32> to vector<4x256xf32>
    %31 = vector.shape_cast %28 : vector<4x256xf32> to vector<1x4x256xf32>
    tpu.vector_store %arg5[%c0_6, %c0_7, %c0_8], %31 {strides = array<i32>} : memref<1x4x256xf32, #tpu.memory_space<vmem>>, vector<1x4x256xf32>,
    return
  }
  func.func @transform_0(%arg0: i32, %arg1: i32) -> (i32, i32, i32) {
    %c0_i32 = arith.constant 0 : i32
    %c0_i32_0 = arith.constant 0 : i32
    return %arg0, %c0_i32, %arg1 : i32, i32, i32
  }
  func.func @transform_1(%arg0: i32, %arg1: i32) -> (i32, i32) {
    %c0_i32 = arith.constant 0 : i32
    %c0_i32_0 = arith.constant 0 : i32
    %c0_i32_1 = arith.constant 0 : i32
    return %c0_i32, %c0_i32_0 : i32, i32
  }
  func.func @transform_2(%arg0: i32, %arg1: i32) -> (i32, i32) {
    %c0_i32 = arith.constant 0 : i32
    %c0_i32_0 = arith.constant 0 : i32
    %c0_i32_1 = arith.constant 0 : i32
    return %c0_i32, %c0_i32_0 : i32, i32
  }
  func.func @transform_3(%arg0: i32, %arg1: i32) -> (i32, i32, i32) {
    %c0_i32 = arith.constant 0 : i32
    %c0_i32_0 = arith.constant 0 : i32
    return %arg0, %c0_i32, %arg1 : i32, i32, i32
  }
}

</mosaic_0001>

<llo_original>
// kernel: tpu_custom_call.1
$region0: #{tpu_custom_call.1}
  #allocation0 [shape = 'u32[]', space=smem, size = 0x4, offset = 0x4, fixed_abs, tag = 'smem constant byte address 0x4 - core index']
  #allocation1 [shape = 'u32[144,128]{1,0:T(1,128)}', space=vmem, size = 0x12000, scoped, tag = 'internal scratch']
  %s0 = inlined_call_operand.hbm [shape: f32[2,4,256], index: 0, kind: input, shape index: {}]
  %s1 = inlined_call_operand.vmem [shape: f32[4,4], index: 1, kind: input, shape index: {}]
  %s2 = inlined_call_operand.vmem [shape: f32[4,1], index: 2, kind: input, shape index: {}]
  %s3 = inlined_call_operand.hbm [shape: f32[2,4,256], index: 3, kind: output, shape index: {}]
  %s4 = sld [smem:[#allocation0]]
  $region49: #{tpu_custom_call.1} parent=0
    _
  %s6 = ssub.s32 1, %s4
  %s7 = scalar_select 0, %s6, %s4
  $region1: #{tpu_custom_call.1} parent=0
    #allocation2 [shape = 'u8[8192]{0}', space=vmem, size = 0x2000, scoped, tag = 'input window, operand 0']
    #allocation3 [shape = 's32[2]{0}', space=sflag, size = 0x8, scoped, tag = 'scoped memory for tpu_custom_call.1']
    #allocation4 [shape = 's32[2]{0}', space=sflag, size = 0x8, scoped, tag = 'scoped memory for tpu_custom_call.1']
    #allocation5 [shape = 'u8[8192]{0}', space=vmem, size = 0x2000, scoped, tag = 'output window, operand 0']
    %8 = vsyncpa [#allocation3], 0
    %s9 = scalar_lea.sflag [#allocation3], 1
    %10 = vsyncpa %s9, 0
    %11 = vsyncpa [#allocation4], 0
    %s12 = scalar_lea.sflag [#allocation4], 1
    %13 = vsyncpa %s12, 0
    loop: start=0, step=1, limit=4
    $region2: #{tpu_custom_call.1} parent=1 // loop_pre_header
      _
    $region3: #{tpu_custom_call.1} parent=1 // loop_header
      %s15 = sphi 0, %s19
      %p16 = scmp.ge.s32.totalorder %s15, 4
      %s22 = sphi 0, %s34
      %s23 = sphi 0, %s30
      %s24 = sphi 0, %s22
      %s25 = sphi 0, %s23
      %s26 = sphi 0, %s24
      %s27 = sphi 0, %s25
      %s39 = sphi 0, %s41
      %s42 = sphi 0, %s39
      %s43 = sphi 0, %s42
      %s59 = sphi 0, %s43
      %s63 = sphi 0, %s63
      %s65 = sphi 0, %s63
      %s66 = sphi 0, %s65
      %s80 = sphi 0, %s66
      %s84 = sphi 0, %s84
      %s86 = sphi 0, %s84
      %s87 = sphi 0, %s86
      %s101 = sphi 0, %s87
      %s109 = sphi 0, %s111
      %s112 = sphi 0, %s109
      %s113 = sphi 0, %s112
      %s129 = sphi 0, %s113
    $region4: #{tpu_custom_call.1} parent=1 // loop_header_branch
      %18 = sbr.rel (%p16) target = $region8
    $region5: #{tpu_custom_call.1} parent=1 // loop_body
      %s20 = ssub.s32 %s15, 1
      %s21 = ssub.s32 %s15, 2
      %s28 = sadd.s32 1, %s23
      %p29 = scmp.ge.s32.totalorder %s28, 1
      %s30 = scalar_select %p29, 0, %s28
      %s31 = sadd.s32 1, %s22
      %s32 = scalar_select %p29, %s31, %s22
      %p33 = scmp.ge.s32.totalorder %s32, 2
      %s34 = scalar_select %p33, 0, %s32
      %s35 = ssub.s32 %s22, %s34
      %s36 = ssub.s32 %s23, %s30
      %s37 = sor.u32 %s35, %s36
      %p38 = scmp.eq.s32.totalorder %s37, 0
      %s40 = sadd.s32 %s39, 1
      %s41 = scalar_select %p38, %s39, %s40
      %p44 = pneg %p38
      %p45 = scmp.eq.s32.totalorder %s15, 1
      %p46 = por %p44, %p45
      %p47 = scmp.ne.s32.totalorder %s39, %s42
      %p48 = scmp.eq.s32.totalorder %s15, 0
      %p49 = por %p47, %p48
      %p50 = scmp.ne.s32.totalorder %s39, %s42
      %p51 = scmp.eq.s32.totalorder %s20, 1
      %p52 = por %p50, %p51
      %p53 = scmp.ne.s32.totalorder %s42, %s43
      %p54 = scmp.eq.s32.totalorder %s20, 0
      %p55 = por %p53, %p54
      %p56 = scmp.ne.s32.totalorder %s42, %s43
      %p57 = scmp.eq.s32.totalorder %s21, 1
      %p58 = por %p56, %p57
      %p60 = scmp.ne.s32.totalorder %s43, %s59
      %p61 = scmp.eq.s32.totalorder %s21, 0
      %p62 = por %p60, %p61
      %s64 = sadd.s32 %s63, 1
      %p67 = scmp.eq.s32.totalorder %s15, 1
      %p68 = scmp.ne.s32.totalorder %s63, %s65
      %p69 = scmp.eq.s32.totalorder %s15, 0
      %p70 = por %p68, %p69
      %p71 = scmp.ne.s32.totalorder %s63, %s65
      %p72 = scmp.eq.s32.totalorder %s20, 1
      %p73 = por %p71, %p72
      %p74 = scmp.ne.s32.totalorder %s65, %s66
      %p75 = scmp.eq.s32.totalorder %s20, 0
      %p76 = por %p74, %p75
      %p77 = scmp.ne.s32.totalorder %s65, %s66
      %p78 = scmp.eq.s32.totalorder %s21, 1
      %p79 = por %p77, %p78
      %p81 = scmp.ne.s32.totalorder %s66, %s80
      %p82 = scmp.eq.s32.totalorder %s21, 0
      %p83 = por %p81, %p82
      %s85 = sadd.s32 %s84, 1
      %p88 = scmp.eq.s32.totalorder %s15, 1
      %p89 = scmp.ne.s32.totalorder %s84, %s86
      %p90 = scmp.eq.s32.totalorder %s15, 0
      %p91 = por %p89, %p90
      %p92 = scmp.ne.s32.totalorder %s84, %s86
      %p93 = scmp.eq.s32.totalorder %s20, 1
      %p94 = por %p92, %p93
      %p95 = scmp.ne.s32.totalorder %s86, %s87
      %p96 = scmp.eq.s32.totalorder %s20, 0
      %p97 = por %p95, %p96
      %p98 = scmp.ne.s32.totalorder %s86, %s87
      %p99 = scmp.eq.s32.totalorder %s21, 1
      %p100 = por %p98, %p99
      %p102 = scmp.ne.s32.totalorder %s87, %s101
      %p103 = scmp.eq.s32.totalorder %s21, 0
      %p104 = por %p102, %p103
      %s105 = ssub.s32 %s22, %s34
      %s106 = ssub.s32 %s23, %s30
      %s107 = sor.u32 %s105, %s106
      %p108 = scmp.eq.s32.totalorder %s107, 0
      %s110 = sadd.s32 %s109, 1
      %s111 = scalar_select %p108, %s109, %s110
      %p114 = pneg %p108
      %p115 = scmp.eq.s32.totalorder %s15, 1
      %p116 = por %p114, %p115
      %p117 = scmp.ne.s32.totalorder %s109, %s112
      %p118 = scmp.eq.s32.totalorder %s15, 0
      %p119 = por %p117, %p118
      %p120 = scmp.ne.s32.totalorder %s109, %s112
      %p121 = scmp.eq.s32.totalorder %s20, 1
      %p122 = por %p120, %p121
      %p123 = scmp.ne.s32.totalorder %s112, %s113
      %p124 = scmp.eq.s32.totalorder %s20, 0
      %p125 = por %p123, %p124
      %p126 = scmp.ne.s32.totalorder %s112, %s113
      %p127 = scmp.eq.s32.totalorder %s21, 1
      %p128 = por %p126, %p127
      %p130 = scmp.ne.s32.totalorder %s113, %s129
      %p131 = scmp.eq.s32.totalorder %s21, 0
      %p132 = por %p130, %p131
      %p133 = scmp.le.s32.totalorder 1, %s15
      %p134 = scmp.lt.s32.totalorder %s15, 3
      %p135 = pnand %p133, %p134
      %p136 = pneg %p135
      // Predicated region
      $region9: #{tpu_custom_call.1} parent=5 // pred_check
        _
      $region10: #{tpu_custom_call.1} parent=5 // pred_check_branch
        %138 = sbr.rel (%p135) target = $region12
      $region11: #{tpu_custom_call.1} parent=5 // pred_region
        %s139 = ssub.s32 %s15, 1
        // Predicated region
        $region13: #{tpu_custom_call.1} parent=11 // pred_check
          %p140 = pneg %p76
        $region14: #{tpu_custom_call.1} parent=11 // pred_check_branch
          %142 = sbr.rel (%p140) target = $region16
        $region15: #{tpu_custom_call.1} parent=11 // pred_region
          _
        $region16: #{tpu_custom_call.1} parent=11 // pred_fallthru
          _
        // Predicated region
        $region17: #{tpu_custom_call.1} parent=11 // pred_check
          %p143 = pneg %p97
        $region18: #{tpu_custom_call.1} parent=11 // pred_check_branch
          %145 = sbr.rel (%p143) target = $region20
        $region19: #{tpu_custom_call.1} parent=11 // pred_region
          _
        $region20: #{tpu_custom_call.1} parent=11 // pred_fallthru
          _
      $region12: #{tpu_custom_call.1} parent=5 // pred_fallthru
        _
      %p146 = scmp.lt.s32.totalorder %s15, 2
      // Predicated region
      $region21: #{tpu_custom_call.1} parent=5 // pred_check
        %p147 = pneg %p146
      $region22: #{tpu_custom_call.1} parent=5 // pred_check_branch
        %149 = sbr.rel (%p147) target = $region24
      $region23: #{tpu_custom_call.1} parent=5 // pred_region
        // Predicated region
        $region25: #{tpu_custom_call.1} parent=23 // pred_check
          %p150 = pneg %p49
        $region26: #{tpu_custom_call.1} parent=23 // pred_check_branch
          %152 = sbr.rel (%p150) target = $region28
        $region27: #{tpu_custom_call.1} parent=23 // pred_region
          %s153 = sand.u32 %s39, 1
          %s154 = scalar_lea.sflag [#allocation3], %s153
          %s155 = sand.u32 %s39, 1
          %s156 = smul.addr %s155, 8
          %s157 = scalar_lea.vmem [#allocation2], %s156
          %s158 = smul.u32 2, %s23
          %s160 = ssub.s32 128, 128
          %161 = vsyncadd %s154, %s160
          %s162 = smul.addr %s22, 2
          %s163 = sadd.s32 %s158, %s162
          %s164 = smul.addr %s163, 64
          %s165 = scalar_lea.hbm %s0, %s164
          %s167 = sshll.u32 %s157, 4
          %s168 = int_to_ptr.vmem [resolvable:$true] %s167
          %170 = dma.hbm_to_vmem [thread:$0]  %s165, 128, %s168, %s154
        $region28: #{tpu_custom_call.1} parent=23 // pred_fallthru
          _
      $region24: #{tpu_custom_call.1} parent=5 // pred_fallthru
        _
      %p171 = scmp.le.s32.totalorder 1, %s15
      %p172 = scmp.lt.s32.totalorder %s15, 3
      %p173 = pnand %p171, %p172
      %p174 = pneg %p173
      // Predicated region
      $region29: #{tpu_custom_call.1} parent=5 // pred_check
        _
      $region30: #{tpu_custom_call.1} parent=5 // pred_check_branch
        %176 = sbr.rel (%p173) target = $region32
      $region31: #{tpu_custom_call.1} parent=5 // pred_region
        %s177 = ssub.s32 %s15, 1
        %s178 = sand.u32 %s42, 1
        %s179 = scalar_lea.sflag [#allocation3], %s178
        %s180 = sand.u32 %s42, 1
        %s181 = smul.addr %s180, 8
        %s182 = scalar_lea.vmem [#allocation2], %s181
        // Predicated region
        $region33: #{tpu_custom_call.1} parent=31 // pred_check
          %p183 = pneg %p55
        $region34: #{tpu_custom_call.1} parent=31 // pred_check_branch
          %185 = sbr.rel (%p183) target = $region36
        $region35: #{tpu_custom_call.1} parent=31 // pred_region
          %186 = dma.done %s179, 128
        $region36: #{tpu_custom_call.1} parent=31 // pred_fallthru
          _
        %s187 = sand.u32 %s42, 1
        %s188 = scalar_lea.sflag [#allocation3], %s187
        %s189 = sand.u32 %s42, 1
        %s190 = smul.addr %s189, 8
        %s191 = scalar_lea.vmem [#allocation2], %s190
        %p192 = pneg %p55
        %p193 = pneg %p52
        %p194 = pneg %p76
        %p195 = pneg %p73
        %p196 = pneg %p97
        %p197 = pneg %p94
        %p198 = pneg %p125
        %p199 = pneg %p122
        %s200 = sand.u32 %s112, 1
        %s201 = scalar_lea.sflag [#allocation4], %s200
        %s202 = sand.u32 %s112, 1
        %s203 = smul.addr %s202, 8
        %s204 = scalar_lea.vmem [#allocation5], %s203
        %s205 = smul.u32 2, %s25
        %s206 = smul.u32 2, %s25
        %v207 = vld [vmem:[%s182] sm:$0xff]
        %v208 = vld [vmem:[%s1] sm:$0xf]
        %v209 = vld [vmem:[%s2] sm:$0xf]
        %211 = vset.pattern.permute.xlu0 0
        %212 = vperm.xlu0 %211, %v208
        %v213 = vpop.permute.xlu0 %212
        %v216 = vlaneseq
        %v217 = vshrl.u32 %v216, 7
        %v218 = vsub.s32 0, %v217
        %v219 = vrot.slane %v207, %v218
        %v220 = vlaneseq
        %v221 = vshrl.u32 %v220, 7
        %v222 = vsub.s32 4, %v221
        %v223 = vrot.slane %v207, %v222
        %v226 = vlaneseq
        %v227 = vshrl.u32 %v226, 7
        %v228 = vsub.s32 0, %v227
        %v229 = vrot.slane %v219, %v228
        %v230 = vlaneseq
        %v231 = vshrl.u32 %v230, 7
        %v232 = vsub.s32 0, %v231
        %v233 = vrot.slane %v223, %v232
        %v234 = vmul.f32 %v213, %v229
        %v235 = vmul.f32 %v213, %v233
        %236 = vset.pattern.permute.xlu0 1
        %237 = vperm.xlu0 %236, %v208
        %v238 = vpop.permute.xlu0 %237
        %v240 = vlaneseq
        %v241 = vshrl.u32 %v240, 7
        %v242 = vsub.s32 1, %v241
        %v243 = vrot.slane %v207, %v242
        %v244 = vlaneseq
        %v245 = vshrl.u32 %v244, 7
        %v246 = vsub.s32 5, %v245
        %v247 = vrot.slane %v207, %v246
        %v250 = vlaneseq
        %v251 = vshrl.u32 %v250, 7
        %v252 = vsub.s32 1, %v251
        %v253 = vrot.slane %v243, %v252
        %v254 = vlaneseq
        %v255 = vshrl.u32 %v254, 7
        %v256 = vsub.s32 1, %v255
        %v257 = vrot.slane %v247, %v256
        %v258 = vmul.f32 %v238, %v253
        %v259 = vmul.f32 %v238, %v257
        %v260 = vadd.f32 %v234, %v258
        %v261 = vadd.f32 %v235, %v259
        %262 = vset.pattern.permute.xlu0 2
        %263 = vperm.xlu0 %262, %v208
        %v264 = vpop.permute.xlu0 %263
        %v266 = vlaneseq
        %v267 = vshrl.u32 %v266, 7
        %v268 = vsub.s32 2, %v267
        %v269 = vrot.slane %v207, %v268
        %v270 = vlaneseq
        %v271 = vshrl.u32 %v270, 7
        %v272 = vsub.s32 6, %v271
        %v273 = vrot.slane %v207, %v272
        %v276 = vlaneseq
        %v277 = vshrl.u32 %v276, 7
        %v278 = vsub.s32 2, %v277
        %v279 = vrot.slane %v269, %v278
        %v280 = vlaneseq
        %v281 = vshrl.u32 %v280, 7
        %v282 = vsub.s32 2, %v281
        %v283 = vrot.slane %v273, %v282
        %v284 = vmul.f32 %v264, %v279
        %v285 = vmul.f32 %v264, %v283
        %v286 = vadd.f32 %v260, %v284
        %v287 = vadd.f32 %v261, %v285
        %288 = vset.pattern.permute.xlu0 3
        %289 = vperm.xlu0 %288, %v208
        %v290 = vpop.permute.xlu0 %289
        %v292 = vlaneseq
        %v293 = vshrl.u32 %v292, 7
        %v294 = vsub.s32 3, %v293
        %v295 = vrot.slane %v207, %v294
        %v296 = vlaneseq
        %v297 = vshrl.u32 %v296, 7
        %v298 = vsub.s32 7, %v297
        %v299 = vrot.slane %v207, %v298
        %v302 = vlaneseq
        %v303 = vshrl.u32 %v302, 7
        %v304 = vsub.s32 3, %v303
        %v305 = vrot.slane %v295, %v304
        %v306 = vlaneseq
        %v307 = vshrl.u32 %v306, 7
        %v308 = vsub.s32 3, %v307
        %v309 = vrot.slane %v299, %v308
        %v310 = vmul.f32 %v290, %v305
        %v311 = vmul.f32 %v290, %v309
        %v312 = vadd.f32 %v286, %v310
        %v313 = vadd.f32 %v287, %v311
        %315 = vset.pattern.permute.xlu0 0
        %316 = vperm.xlu0 %315, %v209
        %v317 = vpop.permute.xlu0 %316
        %v319 = vadd.f32 %v312, %v317
        %v320 = vadd.f32 %v313, %v317
        %v323 = vcombine.low %v319, %v320
        %325 = vst [vmem:[%s204] sm:$0xff] %v323
        %s326 = sand.u32 %s112, 1
        %s327 = scalar_lea.sflag [#allocation4], %s326
        %s328 = sand.u32 %s112, 1
        %s329 = smul.addr %s328, 8
        %s330 = scalar_lea.vmem [#allocation5], %s329
        // Predicated region
        $region37: #{tpu_custom_call.1} parent=31 // pred_check
          %p331 = pneg %p122
        $region38: #{tpu_custom_call.1} parent=31 // pred_check_branch
          %333 = sbr.rel (%p331) target = $region40
        $region39: #{tpu_custom_call.1} parent=31 // pred_region
          %s334 = smul.u32 2, %s25
          %s336 = ssub.s32 128, 128
          %337 = vsyncadd %s327, %s336
          %s338 = smul.addr %s24, 2
          %s339 = sadd.s32 %s334, %s338
          %s340 = smul.addr %s339, 64
          %s341 = scalar_lea.hbm %s3, %s340
          %s343 = sshll.u32 %s330, 4
          %s344 = int_to_ptr.vmem [resolvable:$true] %s343
          %346 = dma.vmem_to_hbm [thread:$0]  %s344, 128, %s341, %s327
        $region40: #{tpu_custom_call.1} parent=31 // pred_fallthru
          _
      $region32: #{tpu_custom_call.1} parent=5 // pred_fallthru
        _
      %p347 = scmp.le.s32.totalorder 2, %s15
      // Predicated region
      $region41: #{tpu_custom_call.1} parent=5 // pred_check
        %p348 = pneg %p347
      $region42: #{tpu_custom_call.1} parent=5 // pred_check_branch
        %350 = sbr.rel (%p348) target = $region44
      $region43: #{tpu_custom_call.1} parent=5 // pred_region
        %s351 = ssub.s32 %s15, 2
        // Predicated region
        $region45: #{tpu_custom_call.1} parent=43 // pred_check
          %p352 = pneg %p128
        $region46: #{tpu_custom_call.1} parent=43 // pred_check_branch
          %354 = sbr.rel (%p352) target = $region48
        $region47: #{tpu_custom_call.1} parent=43 // pred_region
          %s355 = sand.u32 %s113, 1
          %s356 = scalar_lea.sflag [#allocation4], %s355
          %s357 = sand.u32 %s113, 1
          %s358 = smul.addr %s357, 8
          %s359 = scalar_lea.vmem [#allocation5], %s358
          %360 = dma.done %s356, 128
        $region48: #{tpu_custom_call.1} parent=43 // pred_fallthru
          _
      $region44: #{tpu_custom_call.1} parent=5 // pred_fallthru
        _
    $region6: #{tpu_custom_call.1} parent=1 // loop_footer
      %s19 = sadd.s32 1, %s15
    $region7: #{tpu_custom_call.1} parent=1 // loop_footer_branch
      %14 = sbr.rel target = $region3
    $region8: #{tpu_custom_call.1} parent=1 // loop_exit
      _
    %361 = vsyncpa [#allocation3], 1
    %s362 = scalar_lea.sflag [#allocation3], 1
    %363 = vsyncpa %s362, 1
    %364 = vsyncpa [#allocation4], 1
    %s365 = scalar_lea.sflag [#allocation4], 1
    %366 = vsyncpa %s365, 1

</llo_original>
